<compile_context>
chip_gen: v5e
topology: v5e:2x2
jax: 0.10.0
libtpu: 0.0.40
codegen_flags: <defaults>
</compile_context>

<pallas_src>
import functools

import numpy as np
import jax
import jax.numpy as jnp
from jax.experimental import pallas as pl
from jax.experimental.pallas import tpu as pltpu

_EPS = 1e-12


# ----------------------------------------------------------------------------
# Kernels
# ----------------------------------------------------------------------------
def _score(tx, ty, mode):
    if mode == 'dot':
        return tx * ty
    elif mode == 'l1':
        return -jnp.abs(tx - ty)
    elif mode == 'l2':
        d = tx - ty
        return -(d * d)
    else:
        raise Exception('invalid scoring mode')


def _matcher_kernel(tx_ref, ty_ref, o_ref, *, mode, use_norm):
    """Elementwise scoring; optional per-row (last-axis) normalization."""
    tx = tx_ref[...]
    ty = ty_ref[...]
    if use_norm:
        # f32 accumulation for the norm (matters for bf16 inputs).
        txf = tx.astype(jnp.float32)
        tyf = ty.astype(jnp.float32)
        nraw = jnp.sqrt(jnp.sum(txf * txf, axis=-1, keepdims=True))
        # NOTE(review item 7): lax.rsqrt would shorten the EUP chain, but it
        # changes the eps placement (and NaNs on all-zero rows).  The kernel
        # is HBM-bound, so we keep the exact reference form 1/(||tx|| + eps).
        inv1 = pl.reciprocal(nraw + _EPS, approx=False)
        txn = txf * inv1
        # PyTorch quirk: ty is divided by ||tx_normalized|| + eps, and
        # ||tx_normalized|| == ||tx|| * inv1 (identity; saves a second reduce).
        inv2 = pl.reciprocal(nraw * inv1 + _EPS, approx=False)
        tyn = tyf * inv2
        tx, ty = txn, tyn
    o_ref[...] = _score(tx, ty, mode).astype(o_ref.dtype)


def _matcher_norm_grouped_kernel(mask_ref, tx_ref, ty_ref, o_ref, *, mode, h):
    """Norm path for small H (H | 128): G = 128/H logical rows are packed into
    one lane-dense 128-wide row.  Per-group sum-of-squares is computed with a
    block-diagonal (128,128) 0/1 matmul so loads and stores stay unmasked and
    every vreg lane is used."""
    txf = tx_ref[...].astype(jnp.float32)
    tyf = ty_ref[...].astype(jnp.float32)
    m = mask_ref[...]                      # (128, 128) block-diagonal of ones
    xsq = txf * txf
    # Split-compensated matmul: exact-enough group sums regardless of how the
    # backend lowers the f32 matmul (full f32 passes or single bf16 pass).
    hi = xsq.astype(jnp.bfloat16).astype(jnp.float32)
    lo = xsq - hi
    sumsq = (jnp.dot(hi, m, preferred_element_type=jnp.float32)
             + jnp.dot(lo, m, preferred_element_type=jnp.float32))
    nraw = jnp.sqrt(sumsq)                 # per-lane; constant within a group
    inv1 = pl.reciprocal(nraw + _EPS, approx=False)
    txn = txf * inv1
    inv2 = pl.reciprocal(nraw * inv1 + _EPS, approx=False)
    tyn = tyf * inv2
    o_ref[...] = _score(txn, tyn, mode).astype(o_ref.dtype)


# ----------------------------------------------------------------------------
# Tiling / VMEM sizing helpers
# ----------------------------------------------------------------------------
def _round_up(x, m):
    return ((x + m - 1) // m) * m


def _pick_tile_rows(n_rows, lane_width, itemsize, *, f32_temps=0,
                    fixed_bytes=0, budget=24 * 1024 * 1024, target_steps=4,
                    max_rows=8192):
    """Largest row tile that keeps (3 arrays x 2 buffers + f32 temporaries)
    under `budget`, while keeping >= 2-4 grid steps for megacore sharding and
    pipeline overlap when there is enough data."""
    pack = 8 * max(1, 4 // itemsize)          # 8 rows f32, 16 bf16, 32 int8
    per_row = 6 * lane_width * itemsize + f32_temps * lane_width * 4
    avail = max(budget - fixed_bytes, per_row * pack)
    tm = min(n_rows, max_rows, max(pack, avail // per_row))
    # Keep >= 2 (ideally target_steps) grid steps when each step still moves a
    # meaningful amount of data; a 1-step grid idles one v7x TensorCore and
    # disables double-buffering entirely.
    min_step_bytes = 128 * 1024
    steps = min(target_steps,
                (n_rows * lane_width * itemsize) // min_step_bytes,
                n_rows // pack)
    if steps >= 2:
        tm = min(tm, pl.cdiv(n_rows, steps))
    if tm < n_rows:
        tm = max(pack, (tm // pack) * pack)   # keep sublane packing alignment
    else:
        tm = n_rows                           # full dim is always legal
    return tm


def _vmem_limit_bytes(tm, lane_width, itemsize, *, f32_temps=0, fixed_bytes=0):
    """Scoped-VMEM limit derived from actual usage (review item 2), clamped so
    we never claim most of v7x's 64 MiB physical VMEM."""
    pipelined = 6 * tm * lane_width * itemsize        # 3 arrays x 2 buffers
    temps = f32_temps * tm * lane_width * 4
    need = pipelined + temps + fixed_bytes
    return int(min(max(need * 5 // 4 + (2 << 20), 16 << 20), 40 << 20))


# ----------------------------------------------------------------------------
# Wrapper
# ----------------------------------------------------------------------------
def _matcher_elementwise(tx, ty, mode, n, orig_shape, itemsize):
    # NOTE(review item 10): a 3-op elementwise kernel is something XLA fuses
    # at roofline by itself; in a real model one might skip pallas_call here.
    # We keep the kernel (that is the point of the exercise) but fold/pad the
    # data to the widest lane-dense slab for unmasked stores.
    txf = tx.reshape(-1)
    tyf = ty.reshape(-1)
    n_pad = n
    if n % 128 != 0:
        # Pad once in the wrapper so stores are full-width vst, not vst.msk.
        n_pad = _round_up(n, 1024 if n >= 1024 else 128)
        pad = n_pad - n
        txf = jnp.pad(txf, (0, pad))
        tyf = jnp.pad(tyf, (0, pad))
    W = 128
    for cand in (8192, 4096, 2048, 1024, 512, 256, 128):
        if n_pad % cand == 0:
            W = cand
            break
    R = n_pad // W
    tx2 = txf.reshape(R, W)
    ty2 = tyf.reshape(R, W)

    tm = _pick_tile_rows(R, W, itemsize)
    grid = (pl.cdiv(R, tm),)
    kernel = functools.partial(_matcher_kernel, mode=mode, use_norm=False)

    out2 = pl.pallas_call(
        kernel,
        out_shape=jax.ShapeDtypeStruct((R, W), tx.dtype),
        grid_spec=pltpu.PrefetchScalarGridSpec(
            num_scalar_prefetch=0,
            grid=grid,
            in_specs=[pl.BlockSpec((tm, W), lambda i: (i, 0)),
                      pl.BlockSpec((tm, W), lambda i: (i, 0))],
            out_specs=pl.BlockSpec((tm, W), lambda i: (i, 0)),
        ),
        compiler_params=pltpu.CompilerParams(
            dimension_semantics=("parallel",),
            vmem_limit_bytes=_vmem_limit_bytes(tm, W, itemsize),
        ),
        cost_estimate=pl.CostEstimate(
            flops=2 * n_pad, transcendentals=0,
            bytes_accessed=3 * n_pad * itemsize),
    )(tx2, ty2)

    out = out2.reshape(-1)
    if n_pad != n:
        out = out[:n]
    return out.reshape(orig_shape)


def _matcher_norm(tx, ty, mode, n, H, orig_shape, itemsize):
    R = n // H

    # Small-H packing (review item 6): only when it is a pure metadata reshape
    # (H | 128, R % G == 0).  GH is fixed at 128 so the mask matmul stays a
    # negligible fraction of MXU throughput on every generation.
    G = 0
    if 0 < H < 128 and 128 % H == 0 and R % (128 // H) == 0:
        G = 128 // H

    if G > 1:
        GH = 128
        R2 = R // G
        tx2 = tx.reshape(R2, GH)
        ty2 = ty.reshape(R2, GH)
        gid = np.arange(GH) // H
        mask = jnp.asarray((gid[:, None] == gid[None, :]).astype(np.float32))
        fixed = 2 * GH * GH * 4               # mask block (double buffered)
        tm = _pick_tile_rows(R2, GH, itemsize, f32_temps=8, fixed_bytes=fixed)
        grid = (pl.cdiv(R2, tm),)
        kernel = functools.partial(_matcher_norm_grouped_kernel, mode=mode, h=H)
        out2 = pl.pallas_call(
            kernel,
            out_shape=jax.ShapeDtypeStruct((R2, GH), tx.dtype),
            grid_spec=pltpu.PrefetchScalarGridSpec(
                num_scalar_prefetch=0,
                grid=grid,
                in_specs=[pl.BlockSpec((GH, GH), lambda i: (0, 0)),
                          pl.BlockSpec((tm, GH), lambda i: (i, 0)),
                          pl.BlockSpec((tm, GH), lambda i: (i, 0))],
                out_specs=pl.BlockSpec((tm, GH), lambda i: (i, 0)),
            ),
            compiler_params=pltpu.CompilerParams(
                dimension_semantics=("parallel",),
                vmem_limit_bytes=_vmem_limit_bytes(
                    tm, GH, itemsize, f32_temps=8, fixed_bytes=fixed),
            ),
            cost_estimate=pl.CostEstimate(
                flops=7 * n + 4 * GH * n, transcendentals=3 * n,
                bytes_accessed=3 * n * itemsize + GH * GH * 4),
        )(mask, tx2, ty2)
        return out2.reshape(orig_shape)

    # General norm path: H stays on the lane axis (it is the reduction axis).
    tx2 = tx.reshape(R, H)
    ty2 = ty.reshape(R, H)
    tm = _pick_tile_rows(R, H, itemsize, f32_temps=4)
    grid = (pl.cdiv(R, tm),)
    kernel = functools.partial(_matcher_kernel, mode=mode, use_norm=True)
    out2 = pl.pallas_call(
        kernel,
        out_shape=jax.ShapeDtypeStruct((R, H), tx.dtype),
        grid_spec=pltpu.PrefetchScalarGridSpec(
            num_scalar_prefetch=0,
            grid=grid,
            in_specs=[pl.BlockSpec((tm, H), lambda i: (i, 0)),
                      pl.BlockSpec((tm, H), lambda i: (i, 0))],
            out_specs=pl.BlockSpec((tm, H), lambda i: (i, 0)),
        ),
        compiler_params=pltpu.CompilerParams(
            dimension_semantics=("parallel",),
            vmem_limit_bytes=_vmem_limit_bytes(tm, H, itemsize, f32_temps=4),
        ),
        cost_estimate=pl.CostEstimate(
            flops=7 * n, transcendentals=3 * R,
            bytes_accessed=3 * n * itemsize),
    )(tx2, ty2)
    return out2.reshape(orig_shape)


def matcher(tx, ty, r=None, mode='dot', use_norm=False):
    """Pallas implementation of Matcher(mode, use_norm).forward(tx, ty, r)."""
    del r  # unused, kept for interface parity with the PyTorch module
    assert tx.shape == ty.shape and tx.dtype == ty.dtype
    orig_shape = tx.shape
    H = int(orig_shape[-1])
    n = int(np.prod(orig_shape))
    itemsize = jnp.dtype(tx.dtype).itemsize
    if not use_norm:
        return _matcher_elementwise(tx, ty, mode, n, orig_shape, itemsize)
    return _matcher_norm(tx, ty, mode, n, H, orig_shape, itemsize)


# ----------------------------------------------------------------------------
# Pure-JAX reference mirroring the PyTorch forward exactly (incl. the quirk).
# ----------------------------------------------------------------------------
def _matcher_ref(tx, ty, mode='dot', use_norm=False):
    if use_norm:
        tx = tx / (jnp.linalg.norm(tx, axis=-1, keepdims=True) + 1e-12)
        ty = ty / (jnp.linalg.norm(tx, axis=-1, keepdims=True) + 1e-12)
    if mode == 'dot':
        return tx * ty
    elif mode == 'l1':
        return -jnp.abs(tx - ty)
    elif mode == 'l2':
        return -(tx - ty) ** 2
    raise Exception('invalid scoring mode')


if __name__ == "__main__":
    key = jax.random.PRNGKey(0)

    def _check(shape, mode, use_norm, k):
        k1, k2 = jax.random.split(k)
        tx = jax.random.normal(k1, shape, dtype=jnp.float32)
        ty = jax.random.normal(k2, shape, dtype=jnp.float32)
        out = jax.block_until_ready(matcher(tx, ty, mode=mode, use_norm=use_norm))
        ref = _matcher_ref(tx, ty, mode=mode, use_norm=use_norm)
        good = bool(jnp.allclose(out, ref, atol=1e-5, rtol=1e-5))
        if not good:
            print("MISMATCH", shape, mode, use_norm,
                  float(jnp.max(jnp.abs(out - ref))))
        return good

    ok = True
    keys = iter(jax.random.split(key, 32))
    # Main shape: exercises the lane-dense fold and the lane-dense norm path.
    for mode in ('dot', 'l1', 'l2'):
        for use_norm in (False, True):
            ok &= _check((2, 8, 128), mode, use_norm, next(keys))
    # Small-H norm: grouped (G rows per 128-lane row) path.
    ok &= _check((2, 8, 32), 'dot', True, next(keys))
    ok &= _check((2, 8, 32), 'l2', True, next(keys))
    ok &= _check((2, 8, 32), 'dot', False, next(keys))
    # Non-multiple-of-128: padded elementwise path and narrow-H norm fallback.
    ok &= _check((2, 8, 33), 'l1', False, next(keys))
    ok &= _check((2, 8, 33), 'l1', True, next(keys))

    if ok:
        print("KERNEL_OK")
</pallas_src>

<mosaic_0001>
module attributes {stable_mosaic.version = 11 : i64} {
  func.func @_matcher_kernel(%arg0: i32, %arg1: memref<1x2048xf32, #tpu.memory_space<vmem>>, %arg2: memref<1x2048xf32, #tpu.memory_space<vmem>>, %arg3: memref<1x2048xf32, #tpu.memory_space<vmem>>) attributes {dimension_semantics = [#tpu.dimension_semantics<parallel>], iteration_bounds = array<i64: 1>, scalar_prefetch = 0 : i64, scratch_operands = 0 : i64, tpu.core_type = #tpu.core_type<tc>, window_params = [{transform_indices = @transform_0, window_bounds = array<i64: 1, 2048>}, {transform_indices = @transform_1, window_bounds = array<i64: 1, 2048>}, {transform_indices = @transform_2, window_bounds = array<i64: 1, 2048>}]} {
    %c0 = arith.constant 0 : index
    %c0_0 = arith.constant 0 : index
    %0 = vector.load %arg1[%c0, %c0_0] : memref<1x2048xf32, #tpu.memory_space<vmem>>, vector<1x2048xf32>
    %c0_1 = arith.constant 0 : index
    %c0_2 = arith.constant 0 : index
    %1 = vector.load %arg2[%c0_1, %c0_2] : memref<1x2048xf32, #tpu.memory_space<vmem>>, vector<1x2048xf32>
    %2 = arith.mulf %0, %1 : vector<1x2048xf32>
    %c0_3 = arith.constant 0 : index
    %c0_4 = arith.constant 0 : index
    %3 = vector.load %arg3[%c0_3, %c0_4] : memref<1x2048xf32, #tpu.memory_space<vmem>>, vector<1x2048xf32>
    tpu.vector_store %arg3[%c0_3, %c0_4], %2 {strides = array<i32>} : memref<1x2048xf32, #tpu.memory_space<vmem>>, vector<1x2048xf32>,
    return
  }
  func.func @transform_0(%arg0: i32) -> (i32, i32) {
    %c0_i32 = arith.constant 0 : i32
    %c0_i32_0 = arith.constant 0 : i32
    return %arg0, %c0_i32 : i32, i32
  }
  func.func @transform_1(%arg0: i32) -> (i32, i32) {
    %c0_i32 = arith.constant 0 : i32
    %c0_i32_0 = arith.constant 0 : i32
    return %arg0, %c0_i32 : i32, i32
  }
  func.func @transform_2(%arg0: i32) -> (i32, i32) {
    %c0_i32 = arith.constant 0 : i32
    %c0_i32_0 = arith.constant 0 : i32
    return %arg0, %c0_i32 : i32, i32
  }
}

</mosaic_0001>

<llo_original>
// kernel: tpu_custom_call.1
$region0: #{tpu_custom_call.1}
  #allocation0 [shape = 'u32[]', space=smem, size = 0x4, offset = 0x4, fixed_abs, tag = 'smem constant byte address 0x4 - core index']
  #allocation1 [shape = 'u32[72,128]{1,0:T(1,128)}', space=vmem, size = 0x9000, scoped, tag = 'internal scratch']
  %s0 = inlined_call_operand.hbm [shape: f32[1,2048], index: 0, kind: input, shape index: {}]
  %s1 = inlined_call_operand.hbm [shape: f32[1,2048], index: 1, kind: input, shape index: {}]
  %s2 = inlined_call_operand.hbm [shape: f32[1,2048], index: 2, kind: output, shape index: {}]
  %s3 = sld [smem:[#allocation0]]
  $region26: #{tpu_custom_call.1} parent=0
    _
  %s5 = ssub.s32 1, %s3
  %s6 = scalar_select 0, %s5, %s3
  $region1: #{tpu_custom_call.1} parent=0
    #allocation2 [shape = 'u8[8192]{0}', space=vmem, size = 0x2000, scoped, tag = 'input window, operand 0, single buffered']
    #allocation3 [shape = 's32[1]{0}', space=sflag, size = 0x4, scoped, tag = 'scoped memory for tpu_custom_call.1']
    #allocation4 [shape = 's32[1]{0}', space=sflag, size = 0x4, scoped, tag = 'scoped memory for tpu_custom_call.1']
    #allocation5 [shape = 'u8[8192]{0}', space=vmem, size = 0x2000, scoped, tag = 'input window, operand 1, single buffered']
    #allocation6 [shape = 's32[1]{0}', space=sflag, size = 0x4, scoped, tag = 'scoped memory for tpu_custom_call.1']
    #allocation7 [shape = 'u8[8192]{0}', space=vmem, size = 0x2000, scoped, tag = 'output window, operand 0, single buffered']
    %7 = vsyncpa [#allocation3], 0
    %8 = vsyncpa [#allocation6], 0
    %9 = vsyncpa [#allocation4], 0
    // Predicated region
    $region2: #{tpu_custom_call.1} parent=1 // pred_check
      _
    $region3: #{tpu_custom_call.1} parent=1 // pred_check_branch
      %11 = sbr.rel (0) target = $region5
    $region4: #{tpu_custom_call.1} parent=1 // pred_region
      %13 = vsyncadd [#allocation3], 0
      %s15 = sshll.u32 %s0, 4
      %s16 = int_to_ptr.hbm [resolvable:$true] %s15
      %s17 = sshll.u32 [#allocation2], 4
      %s18 = int_to_ptr.vmem [resolvable:$true] %s17
      %20 = dma.hbm_to_vmem [thread:$0]  %s16, 256, %s18, [#allocation3]
    $region5: #{tpu_custom_call.1} parent=1 // pred_fallthru
      _
    // Predicated region
    $region6: #{tpu_custom_call.1} parent=1 // pred_check
      _
    $region7: #{tpu_custom_call.1} parent=1 // pred_check_branch
      %22 = sbr.rel (0) target = $region9
    $region8: #{tpu_custom_call.1} parent=1 // pred_region
      %24 = vsyncadd [#allocation6], 0
      %s26 = sshll.u32 %s1, 4
      %s27 = int_to_ptr.hbm [resolvable:$true] %s26
      %s28 = sshll.u32 [#allocation5], 4
      %s29 = int_to_ptr.vmem [resolvable:$true] %s28
      %31 = dma.hbm_to_vmem [thread:$0]  %s27, 256, %s29, [#allocation6]
    $region9: #{tpu_custom_call.1} parent=1 // pred_fallthru
      _
    // Predicated region
    $region10: #{tpu_custom_call.1} parent=1 // pred_check
      _
    $region11: #{tpu_custom_call.1} parent=1 // pred_check_branch
      %33 = sbr.rel (0) target = $region13
    $region12: #{tpu_custom_call.1} parent=1 // pred_region
      %35 = dma.done [#allocation3], 256
    $region13: #{tpu_custom_call.1} parent=1 // pred_fallthru
      _
    // Predicated region
    $region14: #{tpu_custom_call.1} parent=1 // pred_check
      _
    $region15: #{tpu_custom_call.1} parent=1 // pred_check_branch
      %37 = sbr.rel (0) target = $region17
    $region16: #{tpu_custom_call.1} parent=1 // pred_region
      %39 = dma.done [#allocation6], 256
    $region17: #{tpu_custom_call.1} parent=1 // pred_fallthru
      _
    %v40 = vld [vmem:[#allocation2] sm:$0xff]
    %v41 = vld [vmem:[#allocation2 + $0x8] sm:$0xff]
    %v42 = vld [vmem:[#allocation5] sm:$0xff]
    %v43 = vld [vmem:[#allocation5 + $0x8] sm:$0xff]
    %v44 = vmul.f32 %v40, %v42
    %v45 = vmul.f32 %v41, %v43
    %46 = vst [vmem:[#allocation7] sm:$0xff] %v44
    %47 = vst [vmem:[#allocation7 + $0x8] sm:$0xff] %v45
    // Predicated region
    $region18: #{tpu_custom_call.1} parent=1 // pred_check
      _
    $region19: #{tpu_custom_call.1} parent=1 // pred_check_branch
      %49 = sbr.rel (0) target = $region21
    $region20: #{tpu_custom_call.1} parent=1 // pred_region
      %51 = vsyncadd [#allocation4], 0
      %s53 = sshll.u32 [#allocation7], 4
      %s54 = int_to_ptr.vmem [resolvable:$true] %s53
      %s55 = sshll.u32 %s2, 4
      %s56 = int_to_ptr.hbm [resolvable:$true] %s55
      %58 = dma.vmem_to_hbm [thread:$0]  %s54, 256, %s56, [#allocation4]
    $region21: #{tpu_custom_call.1} parent=1 // pred_fallthru
      _
    // Predicated region
    $region22: #{tpu_custom_call.1} parent=1 // pred_check
      _
    $region23: #{tpu_custom_call.1} parent=1 // pred_check_branch
      %60 = sbr.rel (0) target = $region25
    $region24: #{tpu_custom_call.1} parent=1 // pred_region
      %62 = dma.done [#allocation4], 256
    $region25: #{tpu_custom_call.1} parent=1 // pred_fallthru
      _
    %63 = vsyncpa [#allocation3], 1
    %64 = vsyncpa [#allocation6], 1
    %65 = vsyncpa [#allocation4], 1

</llo_original>
